<compile_context>
chip_gen: v7x
topology: tpu7x:2x2x1
jax: 0.10.0
libtpu: 0.0.40
codegen_flags: <defaults>
</compile_context>

<pallas_src>
import sys

import jax
import jax.numpy as jnp
from jax import lax
from jax.experimental import pallas as pl
from jax.experimental.pallas import tpu as pltpu

_EPS = float(sys.float_info.epsilon)  # 2.220446049250313e-16

# Below this total input size (both tensors), skip pallas_call: fixed launch /
# pipeline overhead dominates the microseconds of real work.
_FAST_PATH_BYTES = 256 * 1024


def _round_up(x, m):
    return ((x + m - 1) // m) * m


def _vmem_capacity_bytes():
    try:
        return int(pltpu.get_tpu_info().vmem_capacity_bytes)
    except Exception:  # non-TPU / interpret / older API: be conservative (v7x per-TC)
        return 64 * 1024 * 1024


def _tile_byte_budget():
    # ~3/8 of physical VMEM for double-buffered inputs + f32 temporaries:
    # ~48 MiB on 128 MiB parts (v5e/v6e), ~24 MiB on v7x (64 MiB per TC).
    cap = _vmem_capacity_bytes()
    return max(16 << 20, min(64 << 20, (cap * 3) // 8))


def _sublane_multiple(itemsize):
    if itemsize >= 4:
        return 8
    if itemsize == 2:
        return 16
    return 32


def _choose_row_tile(B, N, isz_a, isz_b):
    sub = _sublane_multiple(min(isz_a, isz_b))
    if B <= sub:
        return B  # block == full batch dim: always a legal block shape
    # 2x-pipeline-buffered native-dtype inputs + ~4 f32 temporaries per row.
    per_row = 2 * N * (isz_a + isz_b) + 4 * N * 4
    tb = _tile_byte_budget() // per_row
    if B >= 2 * sub:
        # Keep >= 2 grid steps so the "parallel" batch axis can shard across
        # v7x's 2 TensorCores (costs only ~0.35 us/step elsewhere).
        tb = min(tb, _round_up(-(-B // 2), sub))
    if tb >= B:
        return B
    return int(max(sub, (tb // sub) * sub))


def _make_kld_kernel(tb, true_b, mask_rows):
    def kernel(inp_ref, trg_ref, out_ref):
        eps = jnp.float32(_EPS)
        # Cast AFTER the native-dtype VMEM read: HBM traffic stays at the
        # input's natural width; compute runs in f32.
        x = inp_ref[...].astype(jnp.float32)  # (tb, N)
        t = trg_ref[...].astype(jnp.float32)  # (tb, N)

        # Row normalization: one exact reciprocal per row (EUP) broadcast-
        # multiplied across the row (VPU) instead of two per-element divides.
        inv_sx = pl.reciprocal(jnp.sum(x, axis=1, keepdims=True) + eps)  # (tb, 1)
        inv_st = pl.reciprocal(jnp.sum(t, axis=1, keepdims=True) + eps)  # (tb, 1)
        x_n = x * inv_sx
        t_n = t * inv_st

        # KL term: one per-element reciprocal + one log (2 EUP pushes / elem).
        # TODO(synk): on v7x (3.2 TB/s HBM) measure approx=True here in case the
        # EUP becomes the saturating slot; exact kept for tight numerics.
        ratio = t_n * pl.reciprocal(x_n + eps)
        kld = jnp.sum(t_n * jnp.log(eps + ratio), axis=1, keepdims=True)  # (tb, 1)

        if mask_rows:
            # Partial last block: out-of-range rows hold unspecified data; zero
            # their per-row KL so garbage/NaN never reaches out_ref.
            row = pl.program_id(0) * tb + lax.broadcasted_iota(jnp.int32, (tb, 1), 0)
            kld = jnp.where(row < true_b, kld, jnp.zeros_like(kld))

        # Natural (tb, 1) store: no sublane->lane transpose of the reduce result.
        out_ref[...] = kld

    return kernel


def _kld_pure_jax(x2d, t2d):
    eps = _EPS
    x = x2d.astype(jnp.float32)
    t = t2d.astype(jnp.float32)
    xn = x / (jnp.sum(x, axis=1, keepdims=True) + eps)
    tn = t / (jnp.sum(t, axis=1, keepdims=True) + eps)
    return jnp.mean(jnp.sum(tn * jnp.log(eps + tn / (xn + eps)), axis=1))


def kld_loss_1vs1(inp, trg, *, row_tile=None, force_pallas=False):
    """KLDLoss1vs1.forward: mean over batch of per-sample KL divergences."""
    assert inp.shape[0] == trg.shape[0], "Sizes of the distributions doesn't match"
    B = inp.shape[0]
    inp2d = jnp.reshape(inp, (B, -1))
    trg2d = jnp.reshape(trg, (B, -1))
    N = inp2d.shape[1]
    isz_a = jnp.dtype(inp2d.dtype).itemsize
    isz_b = jnp.dtype(trg2d.dtype).itemsize

    # Tiny-input fast path: plain XLA fusion beats pallas_call launch overhead.
    if not force_pallas and (B * N * (isz_a + isz_b)) < _FAST_PATH_BYTES:
        return _kld_pure_jax(inp2d, trg2d)

    sub = _sublane_multiple(min(isz_a, isz_b))
    if row_tile is not None:
        tb = int(row_tile)
        # Keep the (sublane, lane) tiling rule: multiple of `sub`, or the full dim.
        tb = B if tb >= B else max(sub, _round_up(tb, sub))
    else:
        tb = _choose_row_tile(B, N, isz_a, isz_b)

    num_tiles = -(-B // tb)
    mask_rows = (num_tiles * tb) != B  # partial last block handled in-kernel, no jnp.pad

    # TODO(synk): for N so large that a single (sub, N) pair of blocks exceeds
    # the VMEM budget, add a second "arbitrary" grid axis over N with a
    # two-pass row-sum-then-KL accumulation; not needed for saliency-map sizes.
    pipeline_bytes = 2 * tb * N * (isz_a + isz_b)   # double-buffered inputs
    temps_bytes = 6 * tb * N * 4                    # conservative f32 temporaries
    vmem_limit = int(min(_vmem_capacity_bytes(),
                         max(32 << 20, pipeline_bytes + temps_bytes + (4 << 20))))

    kld_rows = pl.pallas_call(
        _make_kld_kernel(tb, B, mask_rows),
        out_shape=jax.ShapeDtypeStruct((num_tiles * tb, 1), jnp.float32),
        grid_spec=pltpu.PrefetchScalarGridSpec(
            num_scalar_prefetch=0,
            grid=(num_tiles,),
            in_specs=[
                pl.BlockSpec((tb, N), lambda i: (i, 0)),
                pl.BlockSpec((tb, N), lambda i: (i, 0)),
            ],
            out_specs=pl.BlockSpec((tb, 1), lambda i: (i, 0)),
        ),
        compiler_params=pltpu.CompilerParams(
            dimension_semantics=("parallel",),
            vmem_limit_bytes=vmem_limit,
        ),
    )(inp2d, trg2d)

    # Out-of-range rows are exact zeros, so a full sum / true-B mean is correct.
    return jnp.sum(kld_rows) / jnp.float32(B)


def _reference(inp, trg):
    # Pure-JAX reference mirroring the PyTorch loop (true divides, batch mean).
    B = inp.shape[0]
    return _kld_pure_jax(jnp.reshape(inp, (B, -1)), jnp.reshape(trg, (B, -1)))


if __name__ == "__main__":
    key = jax.random.PRNGKey(0)
    k1, k2, k3, k4, k5, k6 = jax.random.split(key, 6)

    # Case 1: tiny saliency maps (B=2, 16x16) -> fast path (no kernel launch).
    a1 = jax.random.uniform(k1, (2, 16, 16), dtype=jnp.float32)
    b1 = jax.random.uniform(k2, (2, 16, 16), dtype=jnp.float32)
    out1 = kld_loss_1vs1(a1, b1)
    jax.block_until_ready(out1)
    assert jnp.allclose(out1, _reference(a1, b1), rtol=2e-5, atol=1e-6), (out1, _reference(a1, b1))

    # Case 2: same tiny shapes through the Pallas kernel (single full block).
    out2 = kld_loss_1vs1(a1, b1, force_pallas=True)
    jax.block_until_ready(out2)
    assert jnp.allclose(out2, _reference(a1, b1), rtol=2e-5, atol=1e-6), (out2, _reference(a1, b1))

    # Case 3: partial last block + in-kernel row masking (B=20, tb=8 -> 3 steps).
    a3 = jax.random.uniform(k3, (20, 32, 32), dtype=jnp.float32)
    b3 = jax.random.uniform(k4, (20, 32, 32), dtype=jnp.float32)
    out3 = kld_loss_1vs1(a3, b3, row_tile=8, force_pallas=True)
    jax.block_until_ready(out3)
    assert jnp.allclose(out3, _reference(a3, b3), rtol=2e-5, atol=1e-6), (out3, _reference(a3, b3))

    # Case 4: native bf16 inputs (no wrapper upcast; cast to f32 inside kernel).
    a4 = jax.random.uniform(k5, (16, 32, 32), dtype=jnp.float32).astype(jnp.bfloat16)
    b4 = jax.random.uniform(k6, (16, 32, 32), dtype=jnp.float32).astype(jnp.bfloat16)
    out4 = kld_loss_1vs1(a4, b4, force_pallas=True)
    jax.block_until_ready(out4)
    assert jnp.allclose(out4, _reference(a4, b4), rtol=2e-5, atol=1e-6), (out4, _reference(a4, b4))

    print("KERNEL_OK")
</pallas_src>

<mosaic_0001>
module attributes {stable_mosaic.version = 11 : i64} {
  func.func @kernel(%arg0: i32, %arg1: memref<2x256xf32, #tpu.memory_space<vmem>>, %arg2: memref<2x256xf32, #tpu.memory_space<vmem>>, %arg3: memref<2x1xf32, #tpu.memory_space<vmem>>) attributes {dimension_semantics = [#tpu.dimension_semantics<parallel>], iteration_bounds = array<i64: 1>, scalar_prefetch = 0 : i64, scratch_operands = 0 : i64, tpu.core_type = #tpu.core_type<tc>, window_params = [{transform_indices = @transform_0, window_bounds = array<i64: 2, 256>}, {transform_indices = @transform_1, window_bounds = array<i64: 2, 256>}, {transform_indices = @transform_2, window_bounds = array<i64: 2, 1>}]} {
    %c0 = arith.constant 0 : index
    %c0_0 = arith.constant 0 : index
    %0 = vector.load %arg1[%c0, %c0_0] : memref<2x256xf32, #tpu.memory_space<vmem>>, vector<2x256xf32>
    %c0_1 = arith.constant 0 : index
    %c0_2 = arith.constant 0 : index
    %1 = vector.load %arg2[%c0_1, %c0_2] : memref<2x256xf32, #tpu.memory_space<vmem>>, vector<2x256xf32>
    %cst = arith.constant dense<0.000000e+00> : vector<2xf32>
    %2 = vector.multi_reduction <add>, %0, %cst [1] : vector<2x256xf32> to vector<2xf32>
    %3 = vector.shape_cast %2 : vector<2xf32> to vector<2x1xf32>
    %cst_3 = arith.constant 2.22044605E-16 : f32
    %4 = vector.broadcast %cst_3 : f32 to vector<2x1xf32>
    %5 = arith.addf %3, %4 : vector<2x1xf32>
    %6 = tpu.reciprocal %5 : vector<2x1xf32> -> vector<2x1xf32>
    %cst_4 = arith.constant dense<0.000000e+00> : vector<2xf32>
    %7 = vector.multi_reduction <add>, %1, %cst_4 [1] : vector<2x256xf32> to vector<2xf32>
    %8 = vector.shape_cast %7 : vector<2xf32> to vector<2x1xf32>
    %cst_5 = arith.constant 2.22044605E-16 : f32
    %9 = vector.broadcast %cst_5 : f32 to vector<2x1xf32>
    %10 = arith.addf %8, %9 : vector<2x1xf32>
    %11 = tpu.reciprocal %10 : vector<2x1xf32> -> vector<2x1xf32>
    %12 = vector.broadcast %6 : vector<2x1xf32> to vector<2x256xf32>
    %13 = arith.mulf %0, %12 : vector<2x256xf32>
    %14 = vector.broadcast %11 : vector<2x1xf32> to vector<2x256xf32>
    %15 = arith.mulf %1, %14 : vector<2x256xf32>
    %cst_6 = arith.constant 2.22044605E-16 : f32
    %16 = vector.broadcast %cst_6 : f32 to vector<2x256xf32>
    %17 = arith.addf %13, %16 : vector<2x256xf32>
    %18 = tpu.reciprocal %17 : vector<2x256xf32> -> vector<2x256xf32>
    %19 = arith.mulf %15, %18 : vector<2x256xf32>
    %cst_7 = arith.constant 2.22044605E-16 : f32
    %20 = vector.broadcast %cst_7 : f32 to vector<2x256xf32>
    %21 = arith.addf %20, %19 : vector<2x256xf32>
    %22 = math.log %21 : vector<2x256xf32>
    %23 = arith.mulf %15, %22 : vector<2x256xf32>
    %cst_8 = arith.constant dense<0.000000e+00> : vector<2xf32>
    %24 = vector.multi_reduction <add>, %23, %cst_8 [1] : vector<2x256xf32> to vector<2xf32>
    %25 = vector.shape_cast %24 : vector<2xf32> to vector<2x1xf32>
    %c0_9 = arith.constant 0 : index
    %c0_10 = arith.constant 0 : index
    %26 = vector.load %arg3[%c0_9, %c0_10] : memref<2x1xf32, #tpu.memory_space<vmem>>, vector<2x1xf32>
    tpu.vector_store %arg3[%c0_9, %c0_10], %25 {strides = array<i32>} : memref<2x1xf32, #tpu.memory_space<vmem>>, vector<2x1xf32>,
    return
  }
  func.func @transform_0(%arg0: i32) -> (i32, i32) {
    %c0_i32 = arith.constant 0 : i32
    %c0_i32_0 = arith.constant 0 : i32
    return %arg0, %c0_i32 : i32, i32
  }
  func.func @transform_1(%arg0: i32) -> (i32, i32) {
    %c0_i32 = arith.constant 0 : i32
    %c0_i32_0 = arith.constant 0 : i32
    return %arg0, %c0_i32 : i32, i32
  }
  func.func @transform_2(%arg0: i32) -> (i32, i32) {
    %c0_i32 = arith.constant 0 : i32
    %c0_i32_0 = arith.constant 0 : i32
    return %arg0, %c0_i32 : i32, i32
  }
}

</mosaic_0001>

<llo_original>
// kernel: tpu_custom_call.1
$region0: #{tpu_custom_call.1}
  #allocation0 [shape = 'u32[]', space=smem, size = 0x4, offset = 0x4, fixed_abs, tag = 'smem constant byte address 0x4 - core index']
  #allocation1 [shape = 'u32[144,128]{1,0:T(1,128)}', space=vmem, size = 0x12000, scoped, tag = 'internal scratch']
  %s0 = inlined_call_operand.hbm [shape: f32[2,256], index: 0, kind: input, shape index: {}]
  %s1 = inlined_call_operand.hbm [shape: f32[2,256], index: 1, kind: input, shape index: {}]
  %s2 = inlined_call_operand.vmem [shape: f32[2,1], index: 2, kind: output, shape index: {}]
  %s3 = sld [smem:[#allocation0]]
  $region26: #{tpu_custom_call.1} parent=0
    _
  %s5 = ssub.s32 1, %s3
  %s6 = scalar_select 0, %s5, %s3
  $region1: #{tpu_custom_call.1} parent=0
    #allocation2 [shape = 'u8[2048]{0}', space=vmem, size = 0x800, scoped, tag = 'input window, operand 0, single buffered']
    #allocation3 [shape = 's32[1]{0}', space=sflag, size = 0x4, scoped, tag = 'scoped memory for tpu_custom_call.1']
    #allocation4 [shape = 'u8[2048]{0}', space=vmem, size = 0x800, scoped, tag = 'input window, operand 1, single buffered']
    #allocation5 [shape = 's32[1]{0}', space=sflag, size = 0x4, scoped, tag = 'scoped memory for tpu_custom_call.1']
    %7 = vsyncpa [#allocation3], 0
    %8 = vsyncpa [#allocation5], 0
    // Predicated region
    $region2: #{tpu_custom_call.1} parent=1 // pred_check
      _
    $region3: #{tpu_custom_call.1} parent=1 // pred_check_branch
      %10 = sbr.rel (0) target = $region5
    $region4: #{tpu_custom_call.1} parent=1 // pred_region
      %s12 = ssub.s32 64, 64
      %13 = vsyncadd [#allocation3], %s12
      %s15 = sshll.u32 [#allocation2], 4
      %s16 = int_to_ptr.vmem [resolvable:$true] %s15
      %18 = dma.hbm_to_vmem [thread:$0]  %s0, 64, %s16, [#allocation3]
    $region5: #{tpu_custom_call.1} parent=1 // pred_fallthru
      _
    // Predicated region
    $region6: #{tpu_custom_call.1} parent=1 // pred_check
      _
    $region7: #{tpu_custom_call.1} parent=1 // pred_check_branch
      %20 = sbr.rel (0) target = $region9
    $region8: #{tpu_custom_call.1} parent=1 // pred_region
      %s22 = ssub.s32 64, 64
      %23 = vsyncadd [#allocation5], %s22
      %s25 = sshll.u32 [#allocation4], 4
      %s26 = int_to_ptr.vmem [resolvable:$true] %s25
      %28 = dma.hbm_to_vmem [thread:$0]  %s1, 64, %s26, [#allocation5]
    $region9: #{tpu_custom_call.1} parent=1 // pred_fallthru
      _
    // Predicated region
    $region10: #{tpu_custom_call.1} parent=1 // pred_check
      _
    $region11: #{tpu_custom_call.1} parent=1 // pred_check_branch
      %30 = sbr.rel (0) target = $region13
    $region12: #{tpu_custom_call.1} parent=1 // pred_region
      %31 = dma.done [#allocation3], 64
    $region13: #{tpu_custom_call.1} parent=1 // pred_fallthru
      _
    // Predicated region
    $region14: #{tpu_custom_call.1} parent=1 // pred_check
      _
    $region15: #{tpu_custom_call.1} parent=1 // pred_check_branch
      %33 = sbr.rel (0) target = $region17
    $region16: #{tpu_custom_call.1} parent=1 // pred_region
      %34 = dma.done [#allocation5], 64
    $region17: #{tpu_custom_call.1} parent=1 // pred_fallthru
      _
    %v35 = vld [vmem:[#allocation2] sm:$0xf]
    %v36 = vld [vmem:[#allocation4] sm:$0xf]
    %v39 = vunpack.c.l.s4 1983009808
    %v40 = vunpack.c.0.s8 %v39
    %v41 = vlaneseq
    %v42 = vshrl.u32 %v41, 7
    %v43 = vsub.s32 %v40, %v42
    %v44 = vrot.slane %v35, %v43
    %v45 = vcombine.high %v44, %v44
    %vm48 = vcmask 1041408
    %v49 = vsel %vm48, %v44, 0.0
    %v50 = vsel %vm48, %v45, 0.0
    %v51 = vadd.f32 %v49, %v50
    %52 = vadd.xlane.f32.xlu0 %v51
    %v53 = vpop.xlane.xlu0 %52
    %v54 = vadd.f32 %v53, 2.220446e-16
    %v55 = vrcp.pop %v54
    %v58 = vunpack.c.l.s4 1983009808
    %v59 = vunpack.c.0.s8 %v58
    %v60 = vlaneseq
    %v61 = vshrl.u32 %v60, 7
    %v62 = vsub.s32 %v59, %v61
    %v63 = vrot.slane %v36, %v62
    %v64 = vcombine.high %v63, %v63
    %v67 = vsel %vm48, %v63, 0.0
    %v68 = vsel %vm48, %v64, 0.0
    %v69 = vadd.f32 %v67, %v68
    %70 = vadd.xlane.f32.xlu0 %v69
    %v71 = vpop.xlane.xlu0 %70
    %v72 = vadd.f32 %v71, 2.220446e-16
    %v73 = vrcp.pop %v72
    %v76 = vunpack.c.l.s4 269488144
    %v77 = vunpack.c.0.s8 %v76
    %v78 = vlaneseq
    %v79 = vshrl.u32 %v78, 7
    %v80 = vsub.s32 %v77, %v79
    %v81 = vrot.slane %v55, %v80
    %v83 = vmul.f32 %v35, %v81
    %v86 = vunpack.c.l.s4 269488144
    %v87 = vunpack.c.0.s8 %v86
    %v88 = vlaneseq
    %v89 = vshrl.u32 %v88, 7
    %v90 = vsub.s32 %v87, %v89
    %v91 = vrot.slane %v73, %v90
    %v93 = vmul.f32 %v36, %v91
    %v94 = vadd.f32 %v83, 2.220446e-16
    %v95 = vrcp.pop %v94
    %v96 = vmul.f32 %v93, %v95
    %v97 = vadd.f32 %v96, 2.220446e-16
    %v98 = vlog2.pop %v97
    %v99 = vmul.f32 %v98, 0.6931472
    %v100 = vmul.f32 %v93, %v99
    %v103 = vunpack.c.l.s4 1983009808
    %v104 = vunpack.c.0.s8 %v103
    %v105 = vlaneseq
    %v106 = vshrl.u32 %v105, 7
    %v107 = vsub.s32 %v104, %v106
    %v108 = vrot.slane %v100, %v107
    %v109 = vcombine.high %v108, %v108
    %v112 = vsel %vm48, %v108, 0.0
    %v113 = vsel %vm48, %v109, 0.0
    %v114 = vadd.f32 %v112, %v113
    %115 = vadd.xlane.f32.xlu0 %v114
    %v116 = vpop.xlane.xlu0 %115
    %vm117 = vcmask 1024
    %118 = vst.msk [vmem:[%s2] sm:$0x3] %vm117, %v116
    // Predicated region
    $region18: #{tpu_custom_call.1} parent=1 // pred_check
      _
    $region19: #{tpu_custom_call.1} parent=1 // pred_check_branch
      %120 = sbr.rel (0) target = $region21
    $region20: #{tpu_custom_call.1} parent=1 // pred_region
      _
    $region21: #{tpu_custom_call.1} parent=1 // pred_fallthru
      _
    // Predicated region
    $region22: #{tpu_custom_call.1} parent=1 // pred_check
      _
    $region23: #{tpu_custom_call.1} parent=1 // pred_check_branch
      %122 = sbr.rel (0) target = $region25
    $region24: #{tpu_custom_call.1} parent=1 // pred_region
      _
    $region25: #{tpu_custom_call.1} parent=1 // pred_fallthru
      _
    %123 = vsyncpa [#allocation3], 1
    %124 = vsyncpa [#allocation5], 1

</llo_original>
